<compile_context>
chip_gen: v6e
topology: v6e:2x2x1
jax: 0.10.0
libtpu: 0.0.40
codegen_flags: <defaults>
</compile_context>

<pallas_src>
import functools
import math

import jax
import jax.numpy as jnp
from jax import lax
from jax.experimental import pallas as pl
from jax.experimental.pallas import tpu as pltpu


# ---------------------------------------------------------------------------
# Positional-encoding table (parameter setup, plain JAX — not the hot path).
# ---------------------------------------------------------------------------
def _make_pe(d_model: int, max_len: int = 5000, dtype=jnp.float32) -> jnp.ndarray:
    """Sinusoidal table shaped (max_len, 1, d_model), like the torch buffer."""
    position = jnp.arange(max_len, dtype=jnp.float32)[:, None]              # (L, 1)
    div_term = jnp.exp(
        jnp.arange(0, d_model, 2, dtype=jnp.float32) * (-math.log(10000.0) / d_model)
    )                                                                       # (D/2,)
    ang = position * div_term                                               # (L, D/2)
    pe = jnp.zeros((max_len, d_model), dtype=jnp.float32)
    pe = pe.at[:, 0::2].set(jnp.sin(ang))
    pe = pe.at[:, 1::2].set(jnp.cos(ang))
    return pe[:, None, :].astype(dtype)                                     # (L, 1, D)


# ---------------------------------------------------------------------------
# Portable counter-based PRNG (splitmix32-style finalizer) on int32 only.
# Logical right shifts are emulated with arithmetic shift + mask so every op
# is a plain signed-int32 VPU op (supported by Mosaic and by interpret mode).
# ---------------------------------------------------------------------------
_GOLDEN = -1640531527      # 0x9E3779B9 as int32
_MIX_C1 = 2146121517       # 0x7FEB352D
_MIX_C2 = -2073403765      # 0x846CA68B


def _mix32(x):
    x = x ^ ((x >> 16) & jnp.int32(0x0000FFFF))
    x = x * jnp.int32(_MIX_C1)
    x = x ^ ((x >> 15) & jnp.int32(0x0001FFFF))
    x = x * jnp.int32(_MIX_C2)
    x = x ^ ((x >> 16) & jnp.int32(0x0000FFFF))
    return x


# ---------------------------------------------------------------------------
# Kernel: y = x + pe  (+ inverted dropout when training).
# Works on either a 3-D block (tile_s, B, D) with pe block (tile_s, 1, D), or
# a lane-dense 2-D block (tile_s, B*D) with pe block (tile_s, B*D).
# ---------------------------------------------------------------------------
def _pos_enc_kernel(seed_ref, x_ref, pe_ref, o_ref, *, tile_s, row_stride,
                    keep_threshold, inv_keep, apply_dropout):
    y = x_ref[...] + pe_ref[...]          # pe broadcasts over batch in the 3-D layout

    if apply_dropout:
        shape = y.shape
        row_off = pl.program_id(0) * tile_s
        r = lax.broadcasted_iota(jnp.int32, shape, 0)
        if y.ndim == 3:
            b = lax.broadcasted_iota(jnp.int32, shape, 1)
            d = lax.broadcasted_iota(jnp.int32, shape, 2)
            col = b * jnp.int32(shape[2]) + d
        else:
            col = lax.broadcasted_iota(jnp.int32, shape, 1)
        # Global element id -> block-layout independent (matches both paths).
        lin = (row_off + r) * jnp.int32(row_stride) + col
        z = _mix32(lin * jnp.int32(_GOLDEN) + seed_ref[0])
        z = z & jnp.int32(0x7FFFFFFF)                       # uniform in [0, 2^31)
        keep = z >= jnp.int32(keep_threshold)               # P(keep) = 1 - p
        y = jnp.where(keep, y * jnp.float32(inv_keep), jnp.zeros_like(y))

    o_ref[...] = y.astype(o_ref.dtype)


# ---------------------------------------------------------------------------
# Tile-size selection: biggest sequence tile that keeps the double-buffered
# x-in + out + pe-in blocks within `target_block_bytes` of VMEM, while keeping
# >= 2 grid steps (megacore) when the sequence is long enough.
# ---------------------------------------------------------------------------
def _choose_tile_s(S, io_row_bytes, pe_row_bytes, target_block_bytes, sublane_align):
    per_row = 2 * (2 * io_row_bytes + pe_row_bytes)         # double-buffered x, out, pe
    t = target_block_bytes // max(per_row, 1)
    if t >= S:
        if S < 16:
            return S                                        # tiny: one block
        t = -(-S // 2)                                      # split for v7x's 2 TCs
    if sublane_align:
        t = max(8, (int(t) // 8) * 8)                       # sublane-aligned blocks
    return max(1, min(int(t), S))


# ---------------------------------------------------------------------------
# Wrapper (forward pass of the PyTorch module).
# ---------------------------------------------------------------------------
def positional_encoding(x, pe_table, *, p=0.1, training=False, seed=0,
                        tile_s=None,
                        target_block_bytes=16 << 20,   # v6e can go larger; v7x: keep modest
                        vmem_limit_bytes=48 << 20):
    """x: (S, B, D).  Returns dropout(x + pe[:S]) with the module's semantics."""
    S, B, D = x.shape
    if pe_table.ndim == 2:
        pe_table = pe_table[:, None, :]
    max_len = pe_table.shape[0]
    if S > max_len:
        raise ValueError(f"sequence length {S} exceeds positional table max_len {max_len}")
    if pe_table.shape[-1] != D:
        raise ValueError("d_model mismatch between x and pe_table")

    p = float(p)
    apply_dropout = bool(training) and p > 0.0
    keep_threshold = min(int(round(p * (1 << 31))), 0x7FFFFFFF)
    inv_keep = 1.0 / (1.0 - p) if p < 1.0 else 0.0
    seed_arr = jnp.atleast_1d(jnp.asarray(seed, dtype=jnp.int32))[:1]

    itemsize = jnp.dtype(x.dtype).itemsize
    # Lane-dense layout: D not a multiple of 128 but B*D is -> flatten so stores
    # are full unmasked vst (trades a B-times-larger pe read for dense stores).
    use_flat = (D % 128 != 0) and ((B * D) % 128 == 0)

    if use_flat:
        xk = x.reshape(S, B * D)
        pek = jnp.tile(pe_table[:S, 0, :], (1, B))          # (S, B*D)
        io_row_bytes = B * D * itemsize
        pe_row_bytes = B * D * jnp.dtype(pe_table.dtype).itemsize
    else:
        xk = x
        pek = pe_table                                      # full table; grid bounds access to [:S]
        io_row_bytes = B * D * itemsize
        pe_row_bytes = D * jnp.dtype(pe_table.dtype).itemsize

    if tile_s is None:
        tile_s = _choose_tile_s(S, io_row_bytes, pe_row_bytes,
                                target_block_bytes, sublane_align=use_flat)
    tile_s = int(min(tile_s, S))
    grid = (pl.cdiv(S, tile_s),)

    kernel = functools.partial(
        _pos_enc_kernel, tile_s=tile_s, row_stride=B * D,
        keep_threshold=keep_threshold, inv_keep=inv_keep,
        apply_dropout=apply_dropout)

    if use_flat:
        in_specs = [pl.BlockSpec((tile_s, B * D), lambda i, *_: (i, 0)),
                    pl.BlockSpec((tile_s, B * D), lambda i, *_: (i, 0))]
        out_specs = pl.BlockSpec((tile_s, B * D), lambda i, *_: (i, 0))
        out_shape = jax.ShapeDtypeStruct((S, B * D), x.dtype)
    else:
        in_specs = [pl.BlockSpec((tile_s, B, D), lambda i, *_: (i, 0, 0)),
                    pl.BlockSpec((tile_s, 1, D), lambda i, *_: (i, 0, 0))]
        out_specs = pl.BlockSpec((tile_s, B, D), lambda i, *_: (i, 0, 0))
        out_shape = jax.ShapeDtypeStruct((S, B, D), x.dtype)

    out = pl.pallas_call(
        kernel,
        out_shape=out_shape,
        grid_spec=pltpu.PrefetchScalarGridSpec(
            num_scalar_prefetch=1,            # seed lives in SMEM, runtime value
            grid=grid,
            in_specs=in_specs,
            out_specs=out_specs,
        ),
        compiler_params=pltpu.CompilerParams(
            dimension_semantics=("parallel",),
            vmem_limit_bytes=vmem_limit_bytes,
        ),
        # Input index 1 is x (index 0 is the scalar-prefetch seed): write the
        # result in place over x so no extra HBM output allocation is needed.
        input_output_aliases={1: 0},
    )(seed_arr, xk, pek)

    return out.reshape(S, B, D) if use_flat else out


if __name__ == "__main__":
    # Small shapes consistent with the module's forward: x is (seq, batch, d_model).
    S, B, D = 8, 2, 32
    MAX_LEN = 5000
    P = 0.1

    key = jax.random.PRNGKey(0)
    x = jax.random.normal(key, (S, B, D), dtype=jnp.float32)
    pe_table = _make_pe(D, MAX_LEN)                          # (MAX_LEN, 1, D)

    # --- eval mode (dropout is identity), matches module.eval() -------------
    out_eval = jax.block_until_ready(
        positional_encoding(x, pe_table, p=P, training=False))
    ref = x + pe_table[:S]                                   # broadcast over batch
    assert out_eval.shape == (S, B, D)
    assert jnp.allclose(out_eval, ref, atol=1e-6), "eval-mode mismatch vs reference"

    # --- training mode (in-kernel inverted dropout) --------------------------
    out_train = jax.block_until_ready(
        positional_encoding(x, pe_table, p=P, training=True, seed=1234))
    keep = out_train != 0.0
    scale = 1.0 / (1.0 - P)
    assert jnp.allclose(out_train, jnp.where(keep, ref * scale, 0.0), atol=1e-5), \
        "training-mode kept elements are not scaled (x + pe)"
    n_keep = int(jnp.sum(keep))
    assert 0 < n_keep < S * B * D, "dropout mask is degenerate"

    print("KERNEL_OK")
</pallas_src>

<mosaic_0001>
module attributes {stable_mosaic.version = 11 : i64} {
  func.func @_pos_enc_kernel(%arg0: i32, %arg1: memref<1xi32, #tpu.memory_space<smem>>, %arg2: memref<8x2x32xf32, #tpu.memory_space<vmem>>, %arg3: memref<8x1x32xf32, #tpu.memory_space<vmem>>, %arg4: memref<8x2x32xf32, #tpu.memory_space<vmem>>) attributes {dimension_semantics = [#tpu.dimension_semantics<parallel>], iteration_bounds = array<i64: 1>, scalar_prefetch = 1 : i64, scratch_operands = 0 : i64, tpu.core_type = #tpu.core_type<tc>, window_params = [{transform_indices = @transform_0, window_bounds = array<i64: 8, 2, 32>}, {transform_indices = @transform_1, window_bounds = array<i64: 8, 1, 32>}, {transform_indices = @transform_2, window_bounds = array<i64: 8, 2, 32>}]} {
    %c0 = arith.constant 0 : index
    %c0_0 = arith.constant 0 : index
    %c0_1 = arith.constant 0 : index
    %0 = vector.load %arg2[%c0, %c0_0, %c0_1] : memref<8x2x32xf32, #tpu.memory_space<vmem>>, vector<8x2x32xf32>
    %c0_2 = arith.constant 0 : index
    %c0_3 = arith.constant 0 : index
    %c0_4 = arith.constant 0 : index
    %1 = vector.load %arg3[%c0_2, %c0_3, %c0_4] : memref<8x1x32xf32, #tpu.memory_space<vmem>>, vector<8x1x32xf32>
    %2 = vector.broadcast %1 : vector<8x1x32xf32> to vector<8x2x32xf32>
    %3 = arith.addf %0, %2 : vector<8x2x32xf32>
    %c0_5 = arith.constant 0 : index
    %c0_6 = arith.constant 0 : index
    %c0_7 = arith.constant 0 : index
    %4 = vector.load %arg4[%c0_5, %c0_6, %c0_7] : memref<8x2x32xf32, #tpu.memory_space<vmem>>, vector<8x2x32xf32>
    tpu.vector_store %arg4[%c0_5, %c0_6, %c0_7], %3 {strides = array<i32>} : memref<8x2x32xf32, #tpu.memory_space<vmem>>, vector<8x2x32xf32>,
    return
  }
  func.func @transform_0(%arg0: i32, %arg1: memref<1xi32, #tpu.memory_space<smem>>) -> (i32, i32, i32) {
    %c0_i32 = arith.constant 0 : i32
    %c0_i32_0 = arith.constant 0 : i32
    %c0_i32_1 = arith.constant 0 : i32
    return %arg0, %c0_i32, %c0_i32_0 : i32, i32, i32
  }
  func.func @transform_1(%arg0: i32, %arg1: memref<1xi32, #tpu.memory_space<smem>>) -> (i32, i32, i32) {
    %c0_i32 = arith.constant 0 : i32
    %c0_i32_0 = arith.constant 0 : i32
    %c0_i32_1 = arith.constant 0 : i32
    return %arg0, %c0_i32, %c0_i32_0 : i32, i32, i32
  }
  func.func @transform_2(%arg0: i32, %arg1: memref<1xi32, #tpu.memory_space<smem>>) -> (i32, i32, i32) {
    %c0_i32 = arith.constant 0 : i32
    %c0_i32_0 = arith.constant 0 : i32
    %c0_i32_1 = arith.constant 0 : i32
    return %arg0, %c0_i32, %c0_i32_0 : i32, i32, i32
  }
}

</mosaic_0001>

<llo_original>
// kernel: tpu_custom_call.1
$region0: #{tpu_custom_call.1}
  #allocation0 [shape = 'u32[]', space=smem, size = 0x4, offset = 0x4, fixed_abs, tag = 'smem constant byte address 0x4 - core index']
  #allocation1 [shape = 'u32[144,128]{1,0:T(1,128)}', space=vmem, size = 0x12000, scoped, tag = 'internal scratch']
  #allocation2 [shape = 's32[1]{0}', space=sflag, size = 0x4, scoped, tag = 'scoped memory for tpu_custom_call.1']
  #allocation3 [shape = 's32[1]{0:T(128)S(6)}', space=smem, size = 0x200, scoped, tag = 'prefetched SMEM operand 0']
  %s0 = inlined_call_operand.<no memory space> [shape: s32[1], index: 0, kind: input, shape index: {}]
  %s1 = inlined_call_operand.hbm [shape: f32[8,2,32], index: 1, kind: input, shape index: {}, may-alias: {1,3}]
  %s2 = inlined_call_operand.vmem [shape: f32[5000,1,32], index: 2, kind: input, shape index: {}]
  %s3 = inlined_call_operand.hbm [shape: f32[8,2,32], index: 3, kind: output, shape index: {}, may-alias: {1,3}]
  %s4 = sld [smem:[#allocation0]]
  $region22: #{tpu_custom_call.1} parent=0
    _
  %s6 = ssub.s32 1, %s4
  %s7 = scalar_select 0, %s6, %s4
  %8 = sst [smem:[#allocation3]] %s0
  $region1: #{tpu_custom_call.1} parent=0
    #allocation4 [shape = 'u8[8192]{0}', space=vmem, size = 0x2000, scoped, tag = 'input window, operand 1, single buffered']
    #allocation5 [shape = 's32[1]{0}', space=sflag, size = 0x4, scoped, tag = 'scoped memory for tpu_custom_call.1']
    #allocation6 [shape = 's32[1]{0}', space=sflag, size = 0x4, scoped, tag = 'scoped memory for tpu_custom_call.1']
    #allocation7 [shape = 'u8[8192]{0}', space=vmem, size = 0x2000, scoped, tag = 'output window, operand 0, single buffered']
    %9 = vsyncpa [#allocation5], 0
    %10 = vsyncpa [#allocation6], 0
    // Predicated region
    $region2: #{tpu_custom_call.1} parent=1 // pred_check
      _
    $region3: #{tpu_custom_call.1} parent=1 // pred_check_branch
      %12 = sbr.rel (0) target = $region5
    $region4: #{tpu_custom_call.1} parent=1 // pred_region
      %s14 = ssub.s32 256, 256
      %15 = vsyncadd [#allocation5], %s14
      %s16 = sshll.u32 [#allocation4], 4
      %s17 = int_to_ptr.vmem [resolvable:$true] %s16
      %22 = dma.hbm_to_vmem [thread:$0]  %s1, 256, %s17, [#allocation5], 32, 32, 2
    $region5: #{tpu_custom_call.1} parent=1 // pred_fallthru
      _
    // Predicated region
    $region6: #{tpu_custom_call.1} parent=1 // pred_check
      _
    $region7: #{tpu_custom_call.1} parent=1 // pred_check_branch
      %24 = sbr.rel (0) target = $region9
    $region8: #{tpu_custom_call.1} parent=1 // pred_region
      _
    $region9: #{tpu_custom_call.1} parent=1 // pred_fallthru
      _
    // Predicated region
    $region10: #{tpu_custom_call.1} parent=1 // pred_check
      _
    $region11: #{tpu_custom_call.1} parent=1 // pred_check_branch
      %26 = sbr.rel (0) target = $region13
    $region12: #{tpu_custom_call.1} parent=1 // pred_region
      %27 = dma.done [#allocation5], 256
    $region13: #{tpu_custom_call.1} parent=1 // pred_fallthru
      _
    %v28 = vld [vmem:[#allocation4] sm:$0x3]
    %v29 = vld [vmem:[#allocation4 + $0x2] sm:$0x3]
    %v30 = vld [vmem:[#allocation4 + $0x4] sm:$0x3]
    %v31 = vld [vmem:[#allocation4 + $0x6] sm:$0x3]
    %v32 = vld [vmem:[#allocation4 + $0x8] sm:$0x3]
    %v33 = vld [vmem:[#allocation4 + $0xa] sm:$0x3]
    %v34 = vld [vmem:[#allocation4 + $0xc] sm:$0x3]
    %v35 = vld [vmem:[#allocation4 + $0xe] sm:$0x3]
    %v36 = vld [vmem:[%s2] sm:$0x1]
    %v37 = vld [vmem:[%s2 + $0x1] sm:$0x1]
    %v38 = vld [vmem:[%s2 + $0x2] sm:$0x1]
    %v39 = vld [vmem:[%s2 + $0x3] sm:$0x1]
    %v40 = vld [vmem:[%s2 + $0x4] sm:$0x1]
    %v41 = vld [vmem:[%s2 + $0x5] sm:$0x1]
    %v42 = vld [vmem:[%s2 + $0x6] sm:$0x1]
    %v43 = vld [vmem:[%s2 + $0x7] sm:$0x1]
    %v52 = vlaneseq
    %v53 = vshrl.u32 %v52, 7
    %v54 = vsub.s32 0, %v53
    %v55 = vrot.slane %v36, %v54
    %v56 = vlaneseq
    %v57 = vshrl.u32 %v56, 7
    %v58 = vsub.s32 0, %v57
    %v59 = vrot.slane %v37, %v58
    %v60 = vlaneseq
    %v61 = vshrl.u32 %v60, 7
    %v62 = vsub.s32 0, %v61
    %v63 = vrot.slane %v38, %v62
    %v64 = vlaneseq
    %v65 = vshrl.u32 %v64, 7
    %v66 = vsub.s32 0, %v65
    %v67 = vrot.slane %v39, %v66
    %v68 = vlaneseq
    %v69 = vshrl.u32 %v68, 7
    %v70 = vsub.s32 0, %v69
    %v71 = vrot.slane %v40, %v70
    %v72 = vlaneseq
    %v73 = vshrl.u32 %v72, 7
    %v74 = vsub.s32 0, %v73
    %v75 = vrot.slane %v41, %v74
    %v76 = vlaneseq
    %v77 = vshrl.u32 %v76, 7
    %v78 = vsub.s32 0, %v77
    %v79 = vrot.slane %v42, %v78
    %v80 = vlaneseq
    %v81 = vshrl.u32 %v80, 7
    %v82 = vsub.s32 0, %v81
    %v83 = vrot.slane %v43, %v82
    %v92 = vadd.f32 %v28, %v55
    %v93 = vadd.f32 %v29, %v59
    %v94 = vadd.f32 %v30, %v63
    %v95 = vadd.f32 %v31, %v67
    %v96 = vadd.f32 %v32, %v71
    %v97 = vadd.f32 %v33, %v75
    %v98 = vadd.f32 %v34, %v79
    %v99 = vadd.f32 %v35, %v83
    %vm100 = vcmask 254976
    %101 = vst.msk [vmem:[#allocation7] sm:$0x3] %vm100, %v92
    %102 = vst.msk [vmem:[#allocation7 + $0x2] sm:$0x3] %vm100, %v93
    %103 = vst.msk [vmem:[#allocation7 + $0x4] sm:$0x3] %vm100, %v94
    %104 = vst.msk [vmem:[#allocation7 + $0x6] sm:$0x3] %vm100, %v95
    %105 = vst.msk [vmem:[#allocation7 + $0x8] sm:$0x3] %vm100, %v96
    %106 = vst.msk [vmem:[#allocation7 + $0xa] sm:$0x3] %vm100, %v97
    %107 = vst.msk [vmem:[#allocation7 + $0xc] sm:$0x3] %vm100, %v98
    %108 = vst.msk [vmem:[#allocation7 + $0xe] sm:$0x3] %vm100, %v99
    // Predicated region
    $region14: #{tpu_custom_call.1} parent=1 // pred_check
      _
    $region15: #{tpu_custom_call.1} parent=1 // pred_check_branch
      %110 = sbr.rel (0) target = $region17
    $region16: #{tpu_custom_call.1} parent=1 // pred_region
      %s112 = ssub.s32 256, 256
      %113 = vsyncadd [#allocation6], %s112
      %s114 = sshll.u32 [#allocation7], 4
      %s115 = int_to_ptr.vmem [resolvable:$true] %s114
      %120 = dma.vmem_to_hbm [thread:$0]  %s115, 256, %s3, [#allocation6], 32, 32, 2
    $region17: #{tpu_custom_call.1} parent=1 // pred_fallthru
      _
    // Predicated region
    $region18: #{tpu_custom_call.1} parent=1 // pred_check
      _
    $region19: #{tpu_custom_call.1} parent=1 // pred_check_branch
      %122 = sbr.rel (0) target = $region21
    $region20: #{tpu_custom_call.1} parent=1 // pred_region
      %123 = dma.done [#allocation6], 256
    $region21: #{tpu_custom_call.1} parent=1 // pred_fallthru
      _
    %124 = vsyncpa [#allocation5], 1
    %125 = vsyncpa [#allocation6], 1

</llo_original>
